<compile_context>
chip_gen: v7x
topology: tpu7x:2x2x1
jax: 0.10.0
libtpu: 0.0.40
codegen_flags: <defaults>
</compile_context>

<pallas_src>
from functools import partial

import jax
import jax.numpy as jnp
from jax.experimental import pallas as pl
from jax.experimental.pallas import tpu as pltpu

INIT_NORM_STD = 0.02


# ---------------- Pallas kernel ----------------
def _scale_embedding_kernel(idx_ref, emb_ref, o_ref, *, num_scales):
    # idx_ref: (TBN, 1) int32 -- raw scale values (clamp + offset fused here)
    # emb_ref: (V, H)         -- V = num_scales + 1, VMEM-resident table
    # o_ref:   (TBN, H)       -- same dtype as the table
    idx = jnp.clip(idx_ref[...], 0, num_scales - 1) + 1        # (TBN, 1) in [1, num_scales]

    # Exact VPU select-gather, unrolled over the tiny vocabulary.
    # Row 0 of the table is never selected (idx >= 1), so start from row 1.
    acc = jnp.broadcast_to(emb_ref[pl.ds(1, 1), :], o_ref.shape)   # default: row 1
    for v in range(2, num_scales + 1):
        row = emb_ref[pl.ds(v, 1), :]                              # (1, H)
        acc = jnp.where(idx == v, row, acc)                        # VPU selects
    o_ref[...] = acc


# ---------------- wrapper ----------------
def scale_embedding_forward(scale, scale_embeddings, num_scales, row_tile=2048):
    """scale: int array of arbitrary shape; scale_embeddings: (1, num_scales+1, H).

    Returns (1, *scale.shape, H), matching the PyTorch module.
    """
    H = scale_embeddings.shape[-1]
    V = num_scales + 1
    dtype = scale_embeddings.dtype

    idx_flat = scale.reshape(-1).astype(jnp.int32)   # fold all batch dims into rows
    BN = idx_flat.shape[0]

    # Row tile: multiple of 8 sublanes; capped (v7x-safe: ~TBN*(4+4H) bytes per
    # double-buffered step, far under the 64-MiB VMEM budget at this cap).
    TBN = min(row_tile, max(8, ((BN + 7) // 8) * 8))
    BN_pad = pl.cdiv(BN, TBN) * TBN
    if BN_pad != BN:
        idx_flat = jnp.pad(idx_flat, (0, BN_pad - BN))
    idx2d = idx_flat.reshape(BN_pad, 1)
    emb2d = scale_embeddings.reshape(V, H)

    out = pl.pallas_call(
        partial(_scale_embedding_kernel, num_scales=num_scales),
        grid=(BN_pad // TBN,),
        in_specs=[
            pl.BlockSpec((TBN, 1), lambda i: (i, 0)),   # idx rows: tiled
            pl.BlockSpec((V, H), lambda i: (0, 0)),     # table: whole, resident
        ],
        out_specs=pl.BlockSpec((TBN, H), lambda i: (i, 0)),
        out_shape=jax.ShapeDtypeStruct((BN_pad, H), dtype),
        compiler_params=pltpu.CompilerParams(
            dimension_semantics=("parallel",),          # shard rows across TCs on v7x
        ),
    )(idx2d, emb2d)

    out = out[:BN]
    return out.reshape((1,) + scale.shape + (H,))


# ---------------- pure-JAX reference ----------------
def reference_forward(scale, scale_embeddings, num_scales):
    idx = (jnp.clip(scale, 0, num_scales - 1) + 1).astype(jnp.int32)
    return scale_embeddings[:, idx]   # (1, *scale.shape, H)


if __name__ == "__main__":
    config = dict(hidden_size=32)
    num_scales = 4
    B, N = 2, 8
    H = config["hidden_size"]

    key = jax.random.PRNGKey(0)
    k_emb, k_scale = jax.random.split(key)

    # nn.Parameter(torch.zeros(1, num_scales+1, H)) + normal_(0, 0.02) init
    scale_embeddings = INIT_NORM_STD * jax.random.normal(
        k_emb, (1, num_scales + 1, H), jnp.float32
    )
    # Include out-of-range values so the in-kernel clamp is exercised.
    scale = jax.random.randint(k_scale, (B, N), -2, num_scales + 2, dtype=jnp.int32)

    out = scale_embedding_forward(scale, scale_embeddings, num_scales)
    out = jax.block_until_ready(out)

    ref = reference_forward(scale, scale_embeddings, num_scales)
    assert out.shape == (1, B, N, H), out.shape
    max_err = float(jnp.max(jnp.abs(out - ref)))
    # Select-gather is bit-exact, so this should be 0.0.
    assert jnp.array_equal(out, ref), f"max abs err {max_err}"
    print("KERNEL_OK")
</pallas_src>

<mosaic_0001>
module attributes {stable_mosaic.version = 11 : i64} {
  func.func @_scale_embedding_kernel(%arg0: i32, %arg1: memref<16x1xi32, #tpu.memory_space<vmem>>, %arg2: memref<5x32xf32, #tpu.memory_space<vmem>>, %arg3: memref<16x32xf32, #tpu.memory_space<vmem>>) attributes {dimension_semantics = [#tpu.dimension_semantics<parallel>], iteration_bounds = array<i64: 1>, scalar_prefetch = 0 : i64, scratch_operands = 0 : i64, tpu.core_type = #tpu.core_type<tc>, window_params = [{transform_indices = @transform_0, window_bounds = array<i64: 16, 1>}, {pipeline_mode = #tpu.pipeline_mode<synchronous>, transform_indices = @transform_1, window_bounds = array<i64: 5, 32>}, {transform_indices = @transform_2, window_bounds = array<i64: 16, 32>}]} {
    %c0 = arith.constant 0 : index
    %c0_0 = arith.constant 0 : index
    %0 = vector.load %arg1[%c0, %c0_0] : memref<16x1xi32, #tpu.memory_space<vmem>>, vector<16x1xi32>
    %c0_i32 = arith.constant 0 : i32
    %c3_i32 = arith.constant 3 : i32
    %1 = vector.broadcast %c0_i32 : i32 to vector<16x1xi32>
    %2 = arith.maxsi %1, %0 : vector<16x1xi32>
    %3 = vector.broadcast %c3_i32 : i32 to vector<16x1xi32>
    %4 = arith.minsi %3, %2 : vector<16x1xi32>
    %c1_i32 = arith.constant 1 : i32
    %5 = vector.broadcast %c1_i32 : i32 to vector<16x1xi32>
    %6 = arith.addi %4, %5 : vector<16x1xi32>
    %c1 = arith.constant 1 : index
    %c0_1 = arith.constant 0 : index
    %7 = vector.load %arg2[%c1, %c0_1] : memref<5x32xf32, #tpu.memory_space<vmem>>, vector<1x32xf32>
    %8 = vector.shape_cast %7 : vector<1x32xf32> to vector<1x32xf32>
    %9 = vector.broadcast %8 : vector<1x32xf32> to vector<16x32xf32>
    %c2 = arith.constant 2 : index
    %c0_2 = arith.constant 0 : index
    %10 = vector.load %arg2[%c2, %c0_2] : memref<5x32xf32, #tpu.memory_space<vmem>>, vector<1x32xf32>
    %c2_i32 = arith.constant 2 : i32
    %11 = vector.broadcast %c2_i32 : i32 to vector<16x1xi32>
    %12 = arith.cmpi eq, %6, %11 : vector<16x1xi32>
    %13 = vector.shape_cast %12 : vector<16x1xi1> to vector<16x1xi1>
    %14 = vector.broadcast %13 : vector<16x1xi1> to vector<16x32xi1>
    %15 = vector.shape_cast %10 : vector<1x32xf32> to vector<1x32xf32>
    %16 = vector.broadcast %15 : vector<1x32xf32> to vector<16x32xf32>
    %17 = arith.select %14, %16, %9 : vector<16x32xi1>, vector<16x32xf32>
    %c3 = arith.constant 3 : index
    %c0_3 = arith.constant 0 : index
    %18 = vector.load %arg2[%c3, %c0_3] : memref<5x32xf32, #tpu.memory_space<vmem>>, vector<1x32xf32>
    %c3_i32_4 = arith.constant 3 : i32
    %19 = vector.broadcast %c3_i32_4 : i32 to vector<16x1xi32>
    %20 = arith.cmpi eq, %6, %19 : vector<16x1xi32>
    %21 = vector.shape_cast %20 : vector<16x1xi1> to vector<16x1xi1>
    %22 = vector.broadcast %21 : vector<16x1xi1> to vector<16x32xi1>
    %23 = vector.shape_cast %18 : vector<1x32xf32> to vector<1x32xf32>
    %24 = vector.broadcast %23 : vector<1x32xf32> to vector<16x32xf32>
    %25 = arith.select %22, %24, %17 : vector<16x32xi1>, vector<16x32xf32>
    %c4 = arith.constant 4 : index
    %c0_5 = arith.constant 0 : index
    %26 = vector.load %arg2[%c4, %c0_5] : memref<5x32xf32, #tpu.memory_space<vmem>>, vector<1x32xf32>
    %c4_i32 = arith.constant 4 : i32
    %27 = vector.broadcast %c4_i32 : i32 to vector<16x1xi32>
    %28 = arith.cmpi eq, %6, %27 : vector<16x1xi32>
    %29 = vector.shape_cast %28 : vector<16x1xi1> to vector<16x1xi1>
    %30 = vector.broadcast %29 : vector<16x1xi1> to vector<16x32xi1>
    %31 = vector.shape_cast %26 : vector<1x32xf32> to vector<1x32xf32>
    %32 = vector.broadcast %31 : vector<1x32xf32> to vector<16x32xf32>
    %33 = arith.select %30, %32, %25 : vector<16x32xi1>, vector<16x32xf32>
    %c0_6 = arith.constant 0 : index
    %c0_7 = arith.constant 0 : index
    %34 = vector.load %arg3[%c0_6, %c0_7] : memref<16x32xf32, #tpu.memory_space<vmem>>, vector<16x32xf32>
    tpu.vector_store %arg3[%c0_6, %c0_7], %33 {strides = array<i32>} : memref<16x32xf32, #tpu.memory_space<vmem>>, vector<16x32xf32>,
    return
  }
  func.func @transform_0(%arg0: i32) -> (i32, i32) {
    %c0_i32 = arith.constant 0 : i32
    %c0_i32_0 = arith.constant 0 : i32
    return %arg0, %c0_i32 : i32, i32
  }
  func.func @transform_1(%arg0: i32) -> (i32, i32) {
    %c0_i32 = arith.constant 0 : i32
    %c0_i32_0 = arith.constant 0 : i32
    %c0_i32_1 = arith.constant 0 : i32
    return %c0_i32, %c0_i32_0 : i32, i32
  }
  func.func @transform_2(%arg0: i32) -> (i32, i32) {
    %c0_i32 = arith.constant 0 : i32
    %c0_i32_0 = arith.constant 0 : i32
    return %arg0, %c0_i32 : i32, i32
  }
}

</mosaic_0001>

<llo_original>
// kernel: tpu_custom_call.1
$region0: #{tpu_custom_call.1}
  #allocation0 [shape = 'u32[]', space=smem, size = 0x4, offset = 0x4, fixed_abs, tag = 'smem constant byte address 0x4 - core index']
  #allocation1 [shape = 'u32[144,128]{1,0:T(1,128)}', space=vmem, size = 0x12000, scoped, tag = 'internal scratch']
  %s0 = inlined_call_operand.vmem [shape: s32[16,1], index: 0, kind: input, shape index: {}]
  %s1 = inlined_call_operand.vmem [shape: f32[5,32], index: 1, kind: input, shape index: {}]
  %s2 = inlined_call_operand.hbm [shape: f32[16,32], index: 2, kind: output, shape index: {}]
  %s3 = sld [smem:[#allocation0]]
  $region18: #{tpu_custom_call.1} parent=0
    _
  %s5 = ssub.s32 1, %s3
  %s6 = scalar_select 0, %s5, %s3
  $region1: #{tpu_custom_call.1} parent=0
    #allocation2 [shape = 'u8[8192]{0}', space=vmem, size = 0x2000, scoped, tag = 'output window, operand 0, single buffered']
    #allocation3 [shape = 's32[1]{0}', space=sflag, size = 0x4, scoped, tag = 'scoped memory for tpu_custom_call.1']
    %7 = vsyncpa [#allocation3], 0
    // Predicated region
    $region2: #{tpu_custom_call.1} parent=1 // pred_check
      _
    $region3: #{tpu_custom_call.1} parent=1 // pred_check_branch
      %9 = sbr.rel (0) target = $region5
    $region4: #{tpu_custom_call.1} parent=1 // pred_region
      _
    $region5: #{tpu_custom_call.1} parent=1 // pred_fallthru
      _
    // Predicated region
    $region6: #{tpu_custom_call.1} parent=1 // pred_check
      _
    $region7: #{tpu_custom_call.1} parent=1 // pred_check_branch
      %11 = sbr.rel (0) target = $region9
    $region8: #{tpu_custom_call.1} parent=1 // pred_region
      _
    $region9: #{tpu_custom_call.1} parent=1 // pred_fallthru
      _
    %v12 = vld [vmem:[%s0] sm:$0xff]
    %v13 = vld [vmem:[%s0 + $0x8] sm:$0xff]
    %vm14 = vcmp.gt.s32.totalorder %v12, 0
    %v15 = vsel %vm14, %v12, 0
    %vm16 = vcmp.gt.s32.totalorder %v13, 0
    %v17 = vsel %vm16, %v13, 0
    %vm18 = vcmp.lt.s32.totalorder %v15, 3
    %v19 = vsel %vm18, %v15, 3
    %vm20 = vcmp.lt.s32.totalorder %v17, 3
    %v21 = vsel %vm20, %v17, 3
    %v22 = vadd.s32 %v19, 1
    %v23 = vadd.s32 %v21, 1
    %v24 = vld [vmem:[%s1 + $0x1] sm:$0x1]
    %v25 = vlaneseq
    %v26 = vshrl.u32 %v25, 7
    %v27 = vsub.s32 0, %v26
    %v28 = vrot.slane %v24, %v27
    %v29 = vld [vmem:[%s1 + $0x2] sm:$0x1]
    %vm30 = vcmp.eq.s32.totalorder %v22, 2
    %vm31 = vcmp.eq.s32.totalorder %v23, 2
    %v32 = vsel %vm30, 1, 0
    %v33 = vsel %vm31, 1, 0
    %34 = vset.pattern.permute.xlu0 0
    %35 = vperm.xlu0 %34, %v32
    %v36 = vpop.permute.xlu0 %35
    %37 = vset.pattern.permute.xlu0 0
    %38 = vperm.xlu0 %37, %v33
    %v39 = vpop.permute.xlu0 %38
    %vm40 = vcmp.eq.s32.totalorder %v36, 1
    %vm41 = vcmp.eq.s32.totalorder %v39, 1
    %v42 = vlaneseq
    %v43 = vshrl.u32 %v42, 7
    %v44 = vsub.s32 0, %v43
    %v45 = vrot.slane %v29, %v44
    %v46 = vsel %vm40, %v45, %v28
    %v47 = vsel %vm41, %v45, %v28
    %v48 = vld [vmem:[%s1 + $0x3] sm:$0x1]
    %vm49 = vcmp.eq.s32.totalorder %v22, 3
    %vm50 = vcmp.eq.s32.totalorder %v23, 3
    %v51 = vsel %vm49, 1, 0
    %v52 = vsel %vm50, 1, 0
    %53 = vset.pattern.permute.xlu0 0
    %54 = vperm.xlu0 %53, %v51
    %v55 = vpop.permute.xlu0 %54
    %56 = vset.pattern.permute.xlu0 0
    %57 = vperm.xlu0 %56, %v52
    %v58 = vpop.permute.xlu0 %57
    %vm59 = vcmp.eq.s32.totalorder %v55, 1
    %vm60 = vcmp.eq.s32.totalorder %v58, 1
    %v61 = vlaneseq
    %v62 = vshrl.u32 %v61, 7
    %v63 = vsub.s32 0, %v62
    %v64 = vrot.slane %v48, %v63
    %v65 = vsel %vm59, %v64, %v46
    %v66 = vsel %vm60, %v64, %v47
    %v67 = vld [vmem:[%s1 + $0x4] sm:$0x1]
    %vm68 = vcmp.eq.s32.totalorder %v22, 4
    %vm69 = vcmp.eq.s32.totalorder %v23, 4
    %v70 = vsel %vm68, 1, 0
    %v71 = vsel %vm69, 1, 0
    %72 = vset.pattern.permute.xlu0 0
    %73 = vperm.xlu0 %72, %v70
    %v74 = vpop.permute.xlu0 %73
    %75 = vset.pattern.permute.xlu0 0
    %76 = vperm.xlu0 %75, %v71
    %v77 = vpop.permute.xlu0 %76
    %vm78 = vcmp.eq.s32.totalorder %v74, 1
    %vm79 = vcmp.eq.s32.totalorder %v77, 1
    %v80 = vlaneseq
    %v81 = vshrl.u32 %v80, 7
    %v82 = vsub.s32 0, %v81
    %v83 = vrot.slane %v67, %v82
    %v84 = vsel %vm78, %v83, %v65
    %v85 = vsel %vm79, %v83, %v66
    %vm86 = vcmask 261120
    %87 = vst.msk [vmem:[#allocation2] sm:$0xff] %vm86, %v84
    %88 = vst.msk [vmem:[#allocation2 + $0x8] sm:$0xff] %vm86, %v85
    // Predicated region
    $region10: #{tpu_custom_call.1} parent=1 // pred_check
      _
    $region11: #{tpu_custom_call.1} parent=1 // pred_check_branch
      %90 = sbr.rel (0) target = $region13
    $region12: #{tpu_custom_call.1} parent=1 // pred_region
      %s92 = ssub.s32 256, 256
      %93 = vsyncadd [#allocation3], %s92
      %s94 = sshll.u32 [#allocation2], 4
      %s95 = int_to_ptr.vmem [resolvable:$true] %s94
      %100 = dma.vmem_to_hbm [thread:$0]  %s95, 256, %s2, [#allocation3], 128, 128, 8
    $region13: #{tpu_custom_call.1} parent=1 // pred_fallthru
      _
    // Predicated region
    $region14: #{tpu_custom_call.1} parent=1 // pred_check
      _
    $region15: #{tpu_custom_call.1} parent=1 // pred_check_branch
      %102 = sbr.rel (0) target = $region17
    $region16: #{tpu_custom_call.1} parent=1 // pred_region
      %103 = dma.done [#allocation3], 256
    $region17: #{tpu_custom_call.1} parent=1 // pred_fallthru
      _
    %104 = vsyncpa [#allocation3], 1

</llo_original>
